<compile_context>
chip_gen: v7x
topology: tpu7x:2x2x1
jax: 0.10.0
libtpu: 0.0.40
codegen_flags: <defaults>
</compile_context>

<pallas_src>
import functools

import jax
import jax.numpy as jnp
from jax.experimental import pallas as pl
from jax.experimental.pallas import tpu as pltpu

IN_F, H1, H2, OUT_F = 300, 128, 32, 4


def mlp_kernel(x_ref, w1_ref, b1_ref, w2_ref, b2_ref, w3_ref, b3_ref, o_ref):
    # fc1: cast x to bf16 in-kernel (no extra HBM traffic), bf16 MXU matmul
    # with f32 accumulation, bias + ReLU in f32.
    x = x_ref[...].astype(jnp.bfloat16)
    h1 = jnp.dot(x, w1_ref[...], preferred_element_type=jnp.float32)
    h1 = jnp.maximum(h1 + b1_ref[...], 0.0)
    # fc2 + ReLU: bf16 operands, f32 accumulate / elementwise.
    h2 = jnp.dot(h1.astype(jnp.bfloat16), w2_ref[...],
                 preferred_element_type=jnp.float32)
    h2 = jnp.maximum(h2 + b2_ref[...], 0.0)
    # fc3 + softmax over the last dim (exact normalization).
    logits = jnp.dot(h2.astype(jnp.bfloat16), w3_ref[...],
                     preferred_element_type=jnp.float32)
    logits = logits + b3_ref[...]
    m = jnp.max(logits, axis=-1, keepdims=True)
    e = jnp.exp(logits - m)
    denom = jnp.sum(e, axis=-1, keepdims=True)
    o_ref[...] = (e / denom).astype(o_ref.dtype)


def _round_up(n, m):
    return ((n + m - 1) // m) * m


@functools.partial(jax.jit, static_argnames=("tile_b",))
def net_forward(x, params, tile_b=2048):
    w1, b1, w2, b2, w3, b3 = params
    B = x.shape[0]
    # Row tile: big for pipelining / DMA efficiency, multiple of 8 (sublane),
    # and no bigger than needed for small batches.
    tb = _round_up(min(tile_b, _round_up(B, 8)), 8)
    grid = pl.cdiv(B, tb)

    n_w = IN_F * H1 + H1 * H2 + H2 * OUT_F
    cost = pl.CostEstimate(
        flops=2 * B * n_w,
        transcendentals=B * OUT_F,
        bytes_accessed=B * (IN_F * x.dtype.itemsize + OUT_F * 4)
        + n_w * w1.dtype.itemsize + (H1 + H2 + OUT_F) * 4,
    )

    return pl.pallas_call(
        mlp_kernel,
        out_shape=jax.ShapeDtypeStruct((B, OUT_F), jnp.float32),
        grid_spec=pltpu.PrefetchScalarGridSpec(
            num_scalar_prefetch=0,
            grid=(grid,),
            in_specs=[
                pl.BlockSpec((tb, IN_F), lambda i: (i, 0)),    # x: row-tiled stream
                pl.BlockSpec((IN_F, H1), lambda i: (0, 0)),    # weights/biases resident
                pl.BlockSpec((1, H1), lambda i: (0, 0)),
                pl.BlockSpec((H1, H2), lambda i: (0, 0)),
                pl.BlockSpec((1, H2), lambda i: (0, 0)),
                pl.BlockSpec((H2, OUT_F), lambda i: (0, 0)),
                pl.BlockSpec((1, OUT_F), lambda i: (0, 0)),
            ],
            out_specs=pl.BlockSpec((tb, OUT_F), lambda i: (i, 0)),
        ),
        compiler_params=pltpu.CompilerParams(
            dimension_semantics=("parallel",),
            vmem_limit_bytes=48 * 1024 * 1024,
        ),
        cost_estimate=cost,
    )(x, w1, b1, w2, b2, w3, b3)


def prep_params(params):
    # One-time weight cast to bf16 (MXU-native); biases stay f32 so bias/ReLU/
    # softmax math is exact. Done outside the jitted forward.
    w1, b1, w2, b2, w3, b3 = params
    return (w1.astype(jnp.bfloat16), b1,
            w2.astype(jnp.bfloat16), b2,
            w3.astype(jnp.bfloat16), b3)


def ref_forward(x, prepped):
    # Pure-JAX reference with the same bf16 operand casts / f32 accumulation,
    # so the comparison against the kernel is tight.
    w1, b1, w2, b2, w3, b3 = prepped
    h1 = jnp.dot(x.astype(jnp.bfloat16), w1, preferred_element_type=jnp.float32)
    h1 = jnp.maximum(h1 + b1, 0.0)
    h2 = jnp.dot(h1.astype(jnp.bfloat16), w2, preferred_element_type=jnp.float32)
    h2 = jnp.maximum(h2 + b2, 0.0)
    logits = jnp.dot(h2.astype(jnp.bfloat16), w3, preferred_element_type=jnp.float32)
    logits = logits + b3
    return jax.nn.softmax(logits, axis=-1)


def init_params(key):
    # Deterministic init mimicking PyTorch Linear default (uniform +/- 1/sqrt(fan_in)).
    ks = jax.random.split(key, 6)

    def lin(kw, kb, fan_in, fan_out):
        bound = 1.0 / jnp.sqrt(fan_in)
        w = jax.random.uniform(kw, (fan_in, fan_out), jnp.float32, -bound, bound)
        b = jax.random.uniform(kb, (1, fan_out), jnp.float32, -bound, bound)
        return w, b

    w1, b1 = lin(ks[0], ks[1], IN_F, H1)
    w2, b2 = lin(ks[2], ks[3], H1, H2)
    w3, b3 = lin(ks[4], ks[5], H2, OUT_F)
    return (w1, b1, w2, b2, w3, b3)


if __name__ == "__main__":
    key = jax.random.PRNGKey(0)
    kx, kx2, kp = jax.random.split(key, 3)
    params = prep_params(init_params(kp))

    # Small canonical test shape.
    B = 8
    x = jax.random.normal(kx, (B, IN_F), jnp.float32)
    out = jax.block_until_ready(net_forward(x, params))
    assert out.shape == (B, OUT_F)
    assert jnp.allclose(jnp.sum(out, axis=-1), 1.0, atol=1e-3)
    ref = ref_forward(x, params)
    assert jnp.allclose(out, ref, atol=3e-3), float(jnp.max(jnp.abs(out - ref)))

    # Ragged multi-tile path: B not a multiple of the tile -> partial last block,
    # no wrapper-side padding copy.
    B2 = 200
    x2 = jax.random.normal(kx2, (B2, IN_F), jnp.float32)
    out2 = jax.block_until_ready(net_forward(x2, params, tile_b=64))
    assert out2.shape == (B2, OUT_F)
    assert jnp.allclose(jnp.sum(out2, axis=-1), 1.0, atol=1e-3)
    ref2 = ref_forward(x2, params)
    assert jnp.allclose(out2, ref2, atol=3e-3), float(jnp.max(jnp.abs(out2 - ref2)))

    print("KERNEL_OK")
</pallas_src>

<mosaic_0001>
module attributes {stable_mosaic.version = 11 : i64} {
  func.func @mlp_kernel(%arg0: i32, %arg1: memref<8x300xf32, #tpu.memory_space<vmem>>, %arg2: memref<300x128xbf16, #tpu.memory_space<vmem>>, %arg3: memref<1x128xf32, #tpu.memory_space<vmem>>, %arg4: memref<128x32xbf16, #tpu.memory_space<vmem>>, %arg5: memref<1x32xf32, #tpu.memory_space<vmem>>, %arg6: memref<32x4xbf16, #tpu.memory_space<vmem>>, %arg7: memref<1x4xf32, #tpu.memory_space<vmem>>, %arg8: memref<8x4xf32, #tpu.memory_space<vmem>>) attributes {dimension_semantics = [#tpu.dimension_semantics<parallel>], iteration_bounds = array<i64: 1>, scalar_prefetch = 0 : i64, scratch_operands = 0 : i64, tpu.core_type = #tpu.core_type<tc>, window_params = [{transform_indices = @transform_0, window_bounds = array<i64: 8, 300>}, {pipeline_mode = #tpu.pipeline_mode<synchronous>, transform_indices = @transform_1, window_bounds = array<i64: 300, 128>}, {pipeline_mode = #tpu.pipeline_mode<synchronous>, transform_indices = @transform_2, window_bounds = array<i64: 1, 128>}, {pipeline_mode = #tpu.pipeline_mode<synchronous>, transform_indices = @transform_3, window_bounds = array<i64: 128, 32>}, {pipeline_mode = #tpu.pipeline_mode<synchronous>, transform_indices = @transform_4, window_bounds = array<i64: 1, 32>}, {pipeline_mode = #tpu.pipeline_mode<synchronous>, transform_indices = @transform_5, window_bounds = array<i64: 32, 4>}, {pipeline_mode = #tpu.pipeline_mode<synchronous>, transform_indices = @transform_6, window_bounds = array<i64: 1, 4>}, {transform_indices = @transform_7, window_bounds = array<i64: 8, 4>}]} {
    %c0 = arith.constant 0 : index
    %c0_0 = arith.constant 0 : index
    %0 = vector.load %arg1[%c0, %c0_0] : memref<8x300xf32, #tpu.memory_space<vmem>>, vector<8x300xf32>
    %1 = arith.truncf %0 : vector<8x300xf32> to vector<8x300xbf16>
    %c0_1 = arith.constant 0 : index
    %c0_2 = arith.constant 0 : index
    %2 = vector.load %arg2[%c0_1, %c0_2] : memref<300x128xbf16, #tpu.memory_space<vmem>>, vector<300x128xbf16>
    %cst = arith.constant dense<0.000000e+00> : vector<8x128xf32>
    %3 = tpu.matmul %1, %2, %cst {dimension_numbers = #tpu.dot_dimension_numbers<[1], [0], [0], [1], [0, 0, 1, 1], [], []>} : vector<8x300xbf16>, vector<300x128xbf16>, vector<8x128xf32> -> vector<8x128xf32>
    %c0_3 = arith.constant 0 : index
    %c0_4 = arith.constant 0 : index
    %4 = vector.load %arg3[%c0_3, %c0_4] : memref<1x128xf32, #tpu.memory_space<vmem>>, vector<1x128xf32>
    %5 = vector.broadcast %4 : vector<1x128xf32> to vector<8x128xf32>
    %6 = arith.addf %3, %5 : vector<8x128xf32>
    %cst_5 = arith.constant 0.000000e+00 : f32
    %7 = vector.broadcast %cst_5 : f32 to vector<8x128xf32>
    %8 = arith.maximumf %6, %7 : vector<8x128xf32>
    %9 = arith.truncf %8 : vector<8x128xf32> to vector<8x128xbf16>
    %c0_6 = arith.constant 0 : index
    %c0_7 = arith.constant 0 : index
    %10 = vector.load %arg4[%c0_6, %c0_7] : memref<128x32xbf16, #tpu.memory_space<vmem>>, vector<128x32xbf16>
    %cst_8 = arith.constant dense<0.000000e+00> : vector<8x32xf32>
    %11 = tpu.matmul %9, %10, %cst_8 {dimension_numbers = #tpu.dot_dimension_numbers<[1], [0], [0], [1], [0, 0, 1, 1], [], []>} : vector<8x128xbf16>, vector<128x32xbf16>, vector<8x32xf32> -> vector<8x32xf32>
    %c0_9 = arith.constant 0 : index
    %c0_10 = arith.constant 0 : index
    %12 = vector.load %arg5[%c0_9, %c0_10] : memref<1x32xf32, #tpu.memory_space<vmem>>, vector<1x32xf32>
    %13 = vector.broadcast %12 : vector<1x32xf32> to vector<8x32xf32>
    %14 = arith.addf %11, %13 : vector<8x32xf32>
    %cst_11 = arith.constant 0.000000e+00 : f32
    %15 = vector.broadcast %cst_11 : f32 to vector<8x32xf32>
    %16 = arith.maximumf %14, %15 : vector<8x32xf32>
    %17 = arith.truncf %16 : vector<8x32xf32> to vector<8x32xbf16>
    %c0_12 = arith.constant 0 : index
    %c0_13 = arith.constant 0 : index
    %18 = vector.load %arg6[%c0_12, %c0_13] : memref<32x4xbf16, #tpu.memory_space<vmem>>, vector<32x4xbf16>
    %cst_14 = arith.constant dense<0.000000e+00> : vector<8x4xf32>
    %19 = tpu.matmul %17, %18, %cst_14 {dimension_numbers = #tpu.dot_dimension_numbers<[1], [0], [0], [1], [0, 0, 1, 1], [], []>} : vector<8x32xbf16>, vector<32x4xbf16>, vector<8x4xf32> -> vector<8x4xf32>
    %c0_15 = arith.constant 0 : index
    %c0_16 = arith.constant 0 : index
    %20 = vector.load %arg7[%c0_15, %c0_16] : memref<1x4xf32, #tpu.memory_space<vmem>>, vector<1x4xf32>
    %21 = vector.broadcast %20 : vector<1x4xf32> to vector<8x4xf32>
    %22 = arith.addf %19, %21 : vector<8x4xf32>
    %cst_17 = arith.constant dense<0xFF800000> : vector<8xf32>
    %23 = vector.multi_reduction <maximumf>, %22, %cst_17 [1] : vector<8x4xf32> to vector<8xf32>
    %24 = vector.shape_cast %23 : vector<8xf32> to vector<8x1xf32>
    %25 = vector.broadcast %24 : vector<8x1xf32> to vector<8x4xf32>
    %26 = arith.subf %22, %25 : vector<8x4xf32>
    %27 = math.exp %26 : vector<8x4xf32>
    %cst_18 = arith.constant dense<0.000000e+00> : vector<8xf32>
    %28 = vector.multi_reduction <add>, %27, %cst_18 [1] : vector<8x4xf32> to vector<8xf32>
    %29 = vector.shape_cast %28 : vector<8xf32> to vector<8x1xf32>
    %30 = vector.broadcast %29 : vector<8x1xf32> to vector<8x4xf32>
    %31 = arith.divf %27, %30 : vector<8x4xf32>
    %c0_19 = arith.constant 0 : index
    %c0_20 = arith.constant 0 : index
    %32 = vector.load %arg8[%c0_19, %c0_20] : memref<8x4xf32, #tpu.memory_space<vmem>>, vector<8x4xf32>
    tpu.vector_store %arg8[%c0_19, %c0_20], %31 {strides = array<i32>} : memref<8x4xf32, #tpu.memory_space<vmem>>, vector<8x4xf32>,
    return
  }
  func.func @transform_0(%arg0: i32) -> (i32, i32) {
    %c0_i32 = arith.constant 0 : i32
    %c0_i32_0 = arith.constant 0 : i32
    return %arg0, %c0_i32 : i32, i32
  }
  func.func @transform_1(%arg0: i32) -> (i32, i32) {
    %c0_i32 = arith.constant 0 : i32
    %c0_i32_0 = arith.constant 0 : i32
    %c0_i32_1 = arith.constant 0 : i32
    return %c0_i32, %c0_i32_0 : i32, i32
  }
  func.func @transform_2(%arg0: i32) -> (i32, i32) {
    %c0_i32 = arith.constant 0 : i32
    %c0_i32_0 = arith.constant 0 : i32
    %c0_i32_1 = arith.constant 0 : i32
    return %c0_i32, %c0_i32_0 : i32, i32
  }
  func.func @transform_3(%arg0: i32) -> (i32, i32) {
    %c0_i32 = arith.constant 0 : i32
    %c0_i32_0 = arith.constant 0 : i32
    %c0_i32_1 = arith.constant 0 : i32
    return %c0_i32, %c0_i32_0 : i32, i32
  }
  func.func @transform_4(%arg0: i32) -> (i32, i32) {
    %c0_i32 = arith.constant 0 : i32
    %c0_i32_0 = arith.constant 0 : i32
    %c0_i32_1 = arith.constant 0 : i32
    return %c0_i32, %c0_i32_0 : i32, i32
  }
  func.func @transform_5(%arg0: i32) -> (i32, i32) {
    %c0_i32 = arith.constant 0 : i32
    %c0_i32_0 = arith.constant 0 : i32
    %c0_i32_1 = arith.constant 0 : i32
    return %c0_i32, %c0_i32_0 : i32, i32
  }
  func.func @transform_6(%arg0: i32) -> (i32, i32) {
    %c0_i32 = arith.constant 0 : i32
    %c0_i32_0 = arith.constant 0 : i32
    %c0_i32_1 = arith.constant 0 : i32
    return %c0_i32, %c0_i32_0 : i32, i32
  }
  func.func @transform_7(%arg0: i32) -> (i32, i32) {
    %c0_i32 = arith.constant 0 : i32
    %c0_i32_0 = arith.constant 0 : i32
    return %arg0, %c0_i32 : i32, i32
  }
}

</mosaic_0001>

<llo_original>
// kernel: net_forward.1
$region0: #{net_forward.1}
  #allocation0 [shape = 'u32[]', space=smem, size = 0x4, offset = 0x4, fixed_abs, tag = 'smem constant byte address 0x4 - core index']
  #allocation1 [shape = 'u32[144,128]{1,0:T(1,128)}', space=vmem, size = 0x12000, scoped, tag = 'internal scratch']
  %s0 = inlined_call_operand.vmem [shape: f32[8,300], index: 0, kind: input, shape index: {}]
  %s1 = inlined_call_operand.hbm [shape: bf16[300,128], index: 1, kind: input, shape index: {}]
  %s2 = inlined_call_operand.vmem [shape: f32[1,128], index: 2, kind: input, shape index: {}]
  %s3 = inlined_call_operand.vmem [shape: bf16[128,32], index: 3, kind: input, shape index: {}]
  %s4 = inlined_call_operand.vmem [shape: f32[1,32], index: 4, kind: input, shape index: {}]
  %s5 = inlined_call_operand.vmem [shape: bf16[32,4], index: 5, kind: input, shape index: {}]
  %s6 = inlined_call_operand.vmem [shape: f32[1,4], index: 6, kind: input, shape index: {}]
  %s7 = inlined_call_operand.vmem [shape: f32[8,4], index: 7, kind: output, shape index: {}]
  %s8 = sld [smem:[#allocation0]]
  $region42: #{net_forward.1} parent=0
    _
  %s10 = ssub.s32 1, %s8
  %s11 = scalar_select 0, %s10, %s8
  $region1: #{net_forward.1} parent=0
    #allocation2 [shape = 'u8[77824]{0}', space=vmem, size = 0x13000, scoped, tag = 'input window, operand 1, single buffered']
    #allocation3 [shape = 's32[1]{0}', space=sflag, size = 0x4, scoped, tag = 'scoped memory for net_forward.1']
    %12 = vsyncpa [#allocation3], 0
    // Predicated region
    $region2: #{net_forward.1} parent=1 // pred_check
      _
    $region3: #{net_forward.1} parent=1 // pred_check_branch
      %14 = sbr.rel (0) target = $region5
    $region4: #{net_forward.1} parent=1 // pred_region
      _
    $region5: #{net_forward.1} parent=1 // pred_fallthru
      _
    // Predicated region
    $region6: #{net_forward.1} parent=1 // pred_check
      _
    $region7: #{net_forward.1} parent=1 // pred_check_branch
      %16 = sbr.rel (0) target = $region9
    $region8: #{net_forward.1} parent=1 // pred_region
      %s18 = ssub.s32 2432, 2432
      %19 = vsyncadd [#allocation3], %s18
      %s20 = sshll.u32 [#allocation2], 4
      %s21 = int_to_ptr.vmem [resolvable:$true] %s20
      %26 = dma.hbm_to_vmem [thread:$0]  %s1, 2432, %s21, [#allocation3], 64, 64, 4
    $region9: #{net_forward.1} parent=1 // pred_fallthru
      _
    // Predicated region
    $region10: #{net_forward.1} parent=1 // pred_check
      _
    $region11: #{net_forward.1} parent=1 // pred_check_branch
      %28 = sbr.rel (0) target = $region13
    $region12: #{net_forward.1} parent=1 // pred_region
      _
    $region13: #{net_forward.1} parent=1 // pred_fallthru
      _
    // Predicated region
    $region14: #{net_forward.1} parent=1 // pred_check
      _
    $region15: #{net_forward.1} parent=1 // pred_check_branch
      %30 = sbr.rel (0) target = $region17
    $region16: #{net_forward.1} parent=1 // pred_region
      _
    $region17: #{net_forward.1} parent=1 // pred_fallthru
      _
    // Predicated region
    $region18: #{net_forward.1} parent=1 // pred_check
      _
    $region19: #{net_forward.1} parent=1 // pred_check_branch
      %32 = sbr.rel (0) target = $region21
    $region20: #{net_forward.1} parent=1 // pred_region
      _
    $region21: #{net_forward.1} parent=1 // pred_fallthru
      _
    // Predicated region
    $region22: #{net_forward.1} parent=1 // pred_check
      _
    $region23: #{net_forward.1} parent=1 // pred_check_branch
      %34 = sbr.rel (0) target = $region25
    $region24: #{net_forward.1} parent=1 // pred_region
      _
    $region25: #{net_forward.1} parent=1 // pred_fallthru
      _
    // Predicated region
    $region26: #{net_forward.1} parent=1 // pred_check
      _
    $region27: #{net_forward.1} parent=1 // pred_check_branch
      %36 = sbr.rel (0) target = $region29
    $region28: #{net_forward.1} parent=1 // pred_region
      _
    $region29: #{net_forward.1} parent=1 // pred_fallthru
      _
    // Predicated region
    $region30: #{net_forward.1} parent=1 // pred_check
      _
    $region31: #{net_forward.1} parent=1 // pred_check_branch
      %38 = sbr.rel (0) target = $region33
    $region32: #{net_forward.1} parent=1 // pred_region
      %39 = dma.done [#allocation3], 2432
    $region33: #{net_forward.1} parent=1 // pred_fallthru
      _
    %v41 = vld [vmem:[%s0] sm:$0xff]
    %v42 = vld [vmem:[%s0 + $0x8] sm:$0xff]
    %v43 = vld [vmem:[%s0 + $0x10] sm:$0xff]
    %v44 = vpack.c.bf16 %v41, %v41
    %v45 = vpack.c.bf16 %v42, %v42
    %v46 = vpack.c.bf16 %v43, %v43
    %v47 = vld [vmem:[#allocation2] sm:$0xf]
    %v48 = vld [vmem:[#allocation2 + $0x4] sm:$0xf]
    %v49 = vld [vmem:[#allocation2 + $0x8] sm:$0xf]
    %v50 = vld [vmem:[#allocation2 + $0xc] sm:$0xf]
    %v51 = vld [vmem:[#allocation2 + $0x10] sm:$0xf]
    %v52 = vld [vmem:[#allocation2 + $0x14] sm:$0xf]
    %v53 = vld [vmem:[#allocation2 + $0x18] sm:$0xf]
    %v54 = vld [vmem:[#allocation2 + $0x1c] sm:$0xf]
    %v55 = vld [vmem:[#allocation2 + $0x20] sm:$0xf]
    %v56 = vld [vmem:[#allocation2 + $0x24] sm:$0xf]
    %v57 = vld [vmem:[#allocation2 + $0x28] sm:$0xf]
    %v58 = vld [vmem:[#allocation2 + $0x2c] sm:$0xf]
    %v59 = vld [vmem:[#allocation2 + $0x30] sm:$0xf]
    %v60 = vld [vmem:[#allocation2 + $0x34] sm:$0xf]
    %v61 = vld [vmem:[#allocation2 + $0x38] sm:$0xf]
    %v62 = vld [vmem:[#allocation2 + $0x3c] sm:$0xf]
    %v63 = vld [vmem:[#allocation2 + $0x40] sm:$0xf]
    %v64 = vld [vmem:[#allocation2 + $0x44] sm:$0xf]
    %v65 = vld [vmem:[#allocation2 + $0x48] sm:$0xf]
    %v66 = vld [vmem:[#allocation2 + $0x4c] sm:$0xf]
    %v67 = vld [vmem:[#allocation2 + $0x50] sm:$0xf]
    %v68 = vld [vmem:[#allocation2 + $0x54] sm:$0xf]
    %v69 = vld [vmem:[#allocation2 + $0x58] sm:$0xf]
    %v70 = vld [vmem:[#allocation2 + $0x5c] sm:$0xf]
    %v71 = vld [vmem:[#allocation2 + $0x60] sm:$0xf]
    %v72 = vld [vmem:[#allocation2 + $0x64] sm:$0xf]
    %v73 = vld [vmem:[#allocation2 + $0x68] sm:$0xf]
    %v74 = vld [vmem:[#allocation2 + $0x6c] sm:$0xf]
    %v75 = vld [vmem:[#allocation2 + $0x70] sm:$0xf]
    %v76 = vld [vmem:[#allocation2 + $0x74] sm:$0xf]
    %v77 = vld [vmem:[#allocation2 + $0x78] sm:$0xf]
    %v78 = vld [vmem:[#allocation2 + $0x7c] sm:$0xf]
    %v79 = vld [vmem:[#allocation2 + $0x80] sm:$0xf]
    %v80 = vld [vmem:[#allocation2 + $0x84] sm:$0xf]
    %v81 = vld [vmem:[#allocation2 + $0x88] sm:$0xf]
    %v82 = vld [vmem:[#allocation2 + $0x8c] sm:$0xf]
    %v83 = vld [vmem:[#allocation2 + $0x90] sm:$0xf]
    %v84 = vld [vmem:[#allocation2 + $0x94] sm:$0x3]
    %v85 = vld [vmem:[%s2] sm:$0x1]
    %v87 = vlaneseq
    %v88 = vshrl.u32 %v87, 7
    %v89 = vsub.s32 0, %v88
    %v90 = vrot.slane %v85, %v89
    %v130 = vunpack.c.l.b16 %v47
    %v131 = vunpack.c.l.b16 %v48
    %v132 = vunpack.c.l.b16 %v49
    %v133 = vunpack.c.l.b16 %v50
    %v134 = vunpack.c.l.b16 %v51
    %v135 = vunpack.c.l.b16 %v52
    %v136 = vunpack.c.l.b16 %v53
    %v137 = vunpack.c.l.b16 %v54
    %v138 = vunpack.c.l.b16 %v55
    %v139 = vunpack.c.l.b16 %v56
    %v140 = vunpack.c.l.b16 %v57
    %v141 = vunpack.c.l.b16 %v58
    %v142 = vunpack.c.l.b16 %v59
    %v143 = vunpack.c.l.b16 %v60
    %v144 = vunpack.c.l.b16 %v61
    %v145 = vunpack.c.l.b16 %v62
    %v146 = vunpack.c.l.b16 %v63
    %v147 = vunpack.c.l.b16 %v64
    %v148 = vunpack.c.l.b16 %v65
    %v149 = vunpack.c.l.b16 %v66
    %v150 = vunpack.c.l.b16 %v67
    %v151 = vunpack.c.l.b16 %v68
    %v152 = vunpack.c.l.b16 %v69
    %v153 = vunpack.c.l.b16 %v70
    %v154 = vunpack.c.l.b16 %v71
    %v155 = vunpack.c.l.b16 %v72
    %v156 = vunpack.c.l.b16 %v73
    %v157 = vunpack.c.l.b16 %v74
    %v158 = vunpack.c.l.b16 %v75
    %v159 = vunpack.c.l.b16 %v76
    %v160 = vunpack.c.l.b16 %v77
    %v161 = vunpack.c.l.b16 %v78
    %v162 = vunpack.c.l.b16 %v79
    %v163 = vunpack.c.l.b16 %v80
    %v164 = vunpack.c.l.b16 %v81
    %v165 = vunpack.c.l.b16 %v82
    %v166 = vunpack.c.l.b16 %v83
    %v167 = vunpack.c.l.b16 %v84
    %v168 = vpack.c.b16 %v131, %v130
    %v169 = vpack.c.b16 %v133, %v132
    %v170 = vpack.c.b16 %v135, %v134
    %v171 = vpack.c.b16 %v137, %v136
    %v172 = vpack.c.b16 %v139, %v138
    %v173 = vpack.c.b16 %v141, %v140
    %v174 = vpack.c.b16 %v143, %v142
    %v175 = vpack.c.b16 %v145, %v144
    %v176 = vpack.c.b16 %v147, %v146
    %v177 = vpack.c.b16 %v149, %v148
    %v178 = vpack.c.b16 %v151, %v150
    %v179 = vpack.c.b16 %v153, %v152
    %v180 = vpack.c.b16 %v155, %v154
    %v181 = vpack.c.b16 %v157, %v156
    %v182 = vpack.c.b16 %v159, %v158
    %v183 = vpack.c.b16 %v161, %v160
    %v184 = vpack.c.b16 %v163, %v162
    %v185 = vpack.c.b16 %v165, %v164
    %v186 = vpack.c.b16 %v167, %v166
    %vm205 = vcmask 359424
    %v207 = vsel %vm205, %v46, 0
    %vm209 = vcmask 1045504
    %v211 = vsel %vm209, %v186, 0
    %213 = vmatprep.subr.bf16.mxu0 0
    %214 = vmatpush1.bf16.msra.mxu0 %v168
    %215 = vmatprep.subr.bf16.mxu0 0
    %216 = vmatpush1.bf16.msra.mxu0 %v169
    %217 = vmatprep.subr.bf16.mxu0 0
    %218 = vmatpush1.bf16.msra.mxu0 %v170
    %219 = vmatprep.subr.bf16.mxu0 0
    %220 = vmatpush1.bf16.msra.mxu0 %v171
    %221 = vmatprep.subr.bf16.mxu0 0
    %222 = vmatpush1.bf16.msra.mxu0 %v172
    %223 = vmatprep.subr.bf16.mxu0 0
    %224 = vmatpush1.bf16.msra.mxu0 %v173
    %225 = vmatprep.subr.bf16.mxu0 0
    %226 = vmatpush1.bf16.msra.mxu0 %v174
    %227 = vmatprep.subr.bf16.mxu0 0
    %228 = vmatpush1.bf16.msra.mxu0 %v175
    %229 = vmatprep.subr.bf16.mxu0 0
    %230 = vmatpush1.bf16.msra.mxu0 %v176
    %231 = vmatprep.subr.bf16.mxu0 0
    %232 = vmatpush1.bf16.msra.mxu0 %v177
    %233 = vmatprep.subr.bf16.mxu0 0
    %234 = vmatpush1.bf16.msra.mxu0 %v178
    %235 = vmatprep.subr.bf16.mxu0 0
    %236 = vmatpush1.bf16.msra.mxu0 %v179
    %237 = vmatprep.subr.bf16.mxu0 0
    %238 = vmatpush1.bf16.msra.mxu0 %v180
    %239 = vmatprep.subr.bf16.mxu0 0
    %240 = vmatpush1.bf16.msra.mxu0 %v181
    %241 = vmatprep.subr.bf16.mxu0 0
    %242 = vmatpush1.bf16.msra.mxu0 %v182
    %243 = vmatprep.subr.bf16.mxu0 0
    %244 = vmatpush1.bf16.msra.mxu0 %v183
    %245 = vmatprep.mubr.bf16.mxu0 %v45
    %246 = vmatmul.mubr.bf16.gmra.mrb[0].mxu0 %v44
    %v247 = vpop.f32.mrb[0].mxu0
    %v248 = vadd.f32 %v90, %v247
    %v249 = vpop.f32.mrb[0].mxu0
    %v250 = vpop.f32.mrb[0].mxu0
    %v251 = vpop.f32.mrb[0].mxu0
    %252 = vdwg.mxu0
    %253 = vmatprep.subr.bf16.mxu0 0
    %254 = vmatpush1.bf16.msra.mxu0 %v184
    %255 = vmatprep.subr.bf16.mxu0 0
    %256 = vmatpush1.bf16.msra.mxu0 %v185
    %257 = vmatprep.subr.bf16.mxu0 0
    %258 = vmatpush1.bf16.msra.mxu0 %v211
    %259 = vmatprep.subr.bf16.mxu0 0
    %260 = vmatpush1.bf16.msra.mxu0 0
    %261 = vmatprep.subr.bf16.mxu0 0
    %262 = vmatpush1.bf16.msra.mxu0 0
    %263 = vmatprep.subr.bf16.mxu0 0
    %264 = vmatpush1.bf16.msra.mxu0 0
    %265 = vmatprep.subr.bf16.mxu0 0
    %266 = vmatpush1.bf16.msra.mxu0 0
    %267 = vmatprep.subr.bf16.mxu0 0
    %268 = vmatpush1.bf16.msra.mxu0 0
    %269 = vmatprep.subr.bf16.mxu0 0
    %270 = vmatpush1.bf16.msra.mxu0 0
    %271 = vmatprep.subr.bf16.mxu0 0
    %272 = vmatpush1.bf16.msra.mxu0 0
    %273 = vmatprep.subr.bf16.mxu0 0
    %274 = vmatpush1.bf16.msra.mxu0 0
    %275 = vmatprep.subr.bf16.mxu0 0
    %276 = vmatpush1.bf16.msra.mxu0 0
    %277 = vmatprep.subr.bf16.mxu0 0
    %278 = vmatpush1.bf16.msra.mxu0 0
    %279 = vmatprep.subr.bf16.mxu0 0
    %280 = vmatpush1.bf16.msra.mxu0 0
    %281 = vmatprep.subr.bf16.mxu0 0
    %282 = vmatpush1.bf16.msra.mxu0 0
    %283 = vmatprep.subr.bf16.mxu0 0
    %284 = vmatpush1.bf16.msra.mxu0 0
    %285 = vmatprep.mubr.bf16.mxu0 0
    %286 = vmatmul.mubr.bf16.gmra.mrb[0].mxu0 %v207
    %v287 = vpop.f32.mrb[0].mxu0
    %v288 = vadd.f32 %v248, %v287
    %v289 = vpop.f32.mrb[0].mxu0
    %v290 = vpop.f32.mrb[0].mxu0
    %v291 = vpop.f32.mrb[0].mxu0
    %292 = vdwg.mxu0
    %v293 = vmax.f32 %v288, 0.0
    %v294 = vpack.c.bf16 %v293, %v293
    %v295 = vld [vmem:[%s3] sm:$0xf]
    %v296 = vld [vmem:[%s3 + $0x4] sm:$0xf]
    %v297 = vld [vmem:[%s3 + $0x8] sm:$0xf]
    %v298 = vld [vmem:[%s3 + $0xc] sm:$0xf]
    %v299 = vld [vmem:[%s3 + $0x10] sm:$0xf]
    %v300 = vld [vmem:[%s3 + $0x14] sm:$0xf]
    %v301 = vld [vmem:[%s3 + $0x18] sm:$0xf]
    %v302 = vld [vmem:[%s3 + $0x1c] sm:$0xf]
    %v303 = vld [vmem:[%s3 + $0x20] sm:$0xf]
    %v304 = vld [vmem:[%s3 + $0x24] sm:$0xf]
    %v305 = vld [vmem:[%s3 + $0x28] sm:$0xf]
    %v306 = vld [vmem:[%s3 + $0x2c] sm:$0xf]
    %v307 = vld [vmem:[%s3 + $0x30] sm:$0xf]
    %v308 = vld [vmem:[%s3 + $0x34] sm:$0xf]
    %v309 = vld [vmem:[%s3 + $0x38] sm:$0xf]
    %v310 = vld [vmem:[%s3 + $0x3c] sm:$0xf]
    %v311 = vld [vmem:[%s4] sm:$0x1]
    %v313 = vlaneseq
    %v314 = vshrl.u32 %v313, 7
    %v315 = vsub.s32 0, %v314
    %v316 = vrot.slane %v311, %v315
    %v334 = vunpack.c.l.b16 %v295
    %v335 = vunpack.c.l.b16 %v296
    %v336 = vunpack.c.l.b16 %v297
    %v337 = vunpack.c.l.b16 %v298
    %v338 = vunpack.c.l.b16 %v299
    %v339 = vunpack.c.l.b16 %v300
    %v340 = vunpack.c.l.b16 %v301
    %v341 = vunpack.c.l.b16 %v302
    %v342 = vunpack.c.l.b16 %v303
    %v343 = vunpack.c.l.b16 %v304
    %v344 = vunpack.c.l.b16 %v305
    %v345 = vunpack.c.l.b16 %v306
    %v346 = vunpack.c.l.b16 %v307
    %v347 = vunpack.c.l.b16 %v308
    %v348 = vunpack.c.l.b16 %v309
    %v349 = vunpack.c.l.b16 %v310
    %v350 = vpack.c.b16 %v335, %v334
    %v351 = vpack.c.b16 %v337, %v336
    %v352 = vpack.c.b16 %v339, %v338
    %v353 = vpack.c.b16 %v341, %v340
    %v354 = vpack.c.b16 %v343, %v342
    %v355 = vpack.c.b16 %v345, %v344
    %v356 = vpack.c.b16 %v347, %v346
    %v357 = vpack.c.b16 %v349, %v348
    %366 = vmatprep.subr.bf16.mxu0 0
    %367 = vmatpush1.bf16.msra.mxu0 %v350
    %368 = vmatprep.subr.bf16.mxu0 0
    %369 = vmatpush1.bf16.msra.mxu0 %v351
    %370 = vmatprep.subr.bf16.mxu0 0
    %371 = vmatpush1.bf16.msra.mxu0 %v352
    %372 = vmatprep.subr.bf16.mxu0 0
    %373 = vmatpush1.bf16.msra.mxu0 %v353
    %374 = vmatprep.subr.bf16.mxu0 0
    %375 = vmatpush1.bf16.msra.mxu0 %v354
    %376 = vmatprep.subr.bf16.mxu0 0
    %377 = vmatpush1.bf16.msra.mxu0 %v355
    %378 = vmatprep.subr.bf16.mxu0 0
    %379 = vmatpush1.bf16.msra.mxu0 %v356
    %380 = vmatprep.subr.bf16.mxu0 0
    %381 = vmatpush1.bf16.msra.mxu0 %v357
    %382 = vmatprep.subr.bf16.mxu0 0
    %383 = vmatpush1.bf16.msra.mxu0 0
    %384 = vmatprep.subr.bf16.mxu0 0
    %385 = vmatpush1.bf16.msra.mxu0 0
    %386 = vmatprep.subr.bf16.mxu0 0
    %387 = vmatpush1.bf16.msra.mxu0 0
    %388 = vmatprep.subr.bf16.mxu0 0
    %389 = vmatpush1.bf16.msra.mxu0 0
    %390 = vmatprep.subr.bf16.mxu0 0
    %391 = vmatpush1.bf16.msra.mxu0 0
    %392 = vmatprep.subr.bf16.mxu0 0
    %393 = vmatpush1.bf16.msra.mxu0 0
    %394 = vmatprep.subr.bf16.mxu0 0
    %395 = vmatpush1.bf16.msra.mxu0 0
    %396 = vmatprep.subr.bf16.mxu0 0
    %397 = vmatpush1.bf16.msra.mxu0 0
    %398 = vmatprep.mubr.bf16.mxu0 0
    %399 = vmatmul.mubr.bf16.gmra.mrb[0].mxu0 %v294
    %v400 = vpop.f32.mrb[0].mxu0
    %v401 = vadd.f32 %v316, %v400
    %v402 = vpop.f32.mrb[0].mxu0
    %v403 = vpop.f32.mrb[0].mxu0
    %v404 = vpop.f32.mrb[0].mxu0
    %405 = vdwg.mxu0
    %v406 = vmax.f32 %v401, 0.0
    %v407 = vpack.c.bf16 %v406, %v406
    %v408 = vld [vmem:[%s5] sm:$0xf]
    %v409 = vld [vmem:[%s5 + $0x4] sm:$0xf]
    %v410 = vld [vmem:[%s5 + $0x8] sm:$0xf]
    %v411 = vld [vmem:[%s5 + $0xc] sm:$0xf]
    %v412 = vld [vmem:[%s6] sm:$0x1]
    %v414 = vlaneseq
    %v415 = vshrl.u32 %v414, 7
    %v416 = vsub.s32 0, %v415
    %v417 = vrot.slane %v412, %v416
    %v423 = vunpack.c.l.b16 %v408
    %v424 = vunpack.c.l.b16 %v409
    %v425 = vunpack.c.l.b16 %v410
    %v426 = vunpack.c.l.b16 %v411
    %v427 = vpack.c.b16 %v424, %v423
    %v428 = vpack.c.b16 %v426, %v425
    %vm431 = vcmask 261120
    %v433 = vsel %vm431, %v407, 0
    %435 = vmatprep.subr.bf16.mxu0 0
    %436 = vmatpush1.bf16.msra.mxu0 %v427
    %437 = vmatprep.subr.bf16.mxu0 0
    %438 = vmatpush1.bf16.msra.mxu0 %v428
    %439 = vmatprep.subr.bf16.mxu0 0
    %440 = vmatpush1.bf16.msra.mxu0 0
    %441 = vmatprep.subr.bf16.mxu0 0
    %442 = vmatpush1.bf16.msra.mxu0 0
    %443 = vmatprep.subr.bf16.mxu0 0
    %444 = vmatpush1.bf16.msra.mxu0 0
    %445 = vmatprep.subr.bf16.mxu0 0
    %446 = vmatpush1.bf16.msra.mxu0 0
    %447 = vmatprep.subr.bf16.mxu0 0
    %448 = vmatpush1.bf16.msra.mxu0 0
    %449 = vmatprep.subr.bf16.mxu0 0
    %450 = vmatpush1.bf16.msra.mxu0 0
    %451 = vmatprep.subr.bf16.mxu0 0
    %452 = vmatpush1.bf16.msra.mxu0 0
    %453 = vmatprep.subr.bf16.mxu0 0
    %454 = vmatpush1.bf16.msra.mxu0 0
    %455 = vmatprep.subr.bf16.mxu0 0
    %456 = vmatpush1.bf16.msra.mxu0 0
    %457 = vmatprep.subr.bf16.mxu0 0
    %458 = vmatpush1.bf16.msra.mxu0 0
    %459 = vmatprep.subr.bf16.mxu0 0
    %460 = vmatpush1.bf16.msra.mxu0 0
    %461 = vmatprep.subr.bf16.mxu0 0
    %462 = vmatpush1.bf16.msra.mxu0 0
    %463 = vmatprep.subr.bf16.mxu0 0
    %464 = vmatpush1.bf16.msra.mxu0 0
    %465 = vmatprep.subr.bf16.mxu0 0
    %466 = vmatpush1.bf16.msra.mxu0 0
    %467 = vmatprep.mubr.bf16.mxu0 0
    %468 = vmatmul.mubr.bf16.gmra.mrb[0].mxu0 %v433
    %v469 = vpop.f32.mrb[0].mxu0
    %v470 = vadd.f32 %v417, %v469
    %v471 = vpop.f32.mrb[0].mxu0
    %v472 = vpop.f32.mrb[0].mxu0
    %v473 = vpop.f32.mrb[0].mxu0
    %474 = vdwg.mxu0
    %vm475 = vcmask 31744
    %v476 = vsel %vm475, %v470, -inf
    %477 = vmax.xlane.f32.xlu0 %v476
    %v478 = vpop.xlane.xlu0 %477
    %v479 = vsub.f32 %v470, %v478
    %v480 = vmul.f32 %v479, 1.442695
    %v481 = vpow.pop %v480
    %v482 = vsel %vm475, %v481, 0.0
    %483 = vadd.xlane.f32.xlu0 %v482
    %v484 = vpop.xlane.xlu0 %483
    %v485 = vrcp.pop %v484
    %v486 = vmul.f32 %v481, %v485
    %487 = vst.msk [vmem:[%s7] sm:$0xff] %vm475, %v486
    // Predicated region
    $region34: #{net_forward.1} parent=1 // pred_check
      _
    $region35: #{net_forward.1} parent=1 // pred_check_branch
      %489 = sbr.rel (0) target = $region37
    $region36: #{net_forward.1} parent=1 // pred_region
      _
    $region37: #{net_forward.1} parent=1 // pred_fallthru
      _
    // Predicated region
    $region38: #{net_forward.1} parent=1 // pred_check
      _
    $region39: #{net_forward.1} parent=1 // pred_check_branch
      %491 = sbr.rel (0) target = $region41
    $region40: #{net_forward.1} parent=1 // pred_region
      _
    $region41: #{net_forward.1} parent=1 // pred_fallthru
      _
    %492 = vsyncpa [#allocation3], 1

</llo_original>
